<compile_context>
chip_gen: v5e
topology: v5e:2x2
jax: 0.10.0
libtpu: 0.0.40
codegen_flags: <defaults>
</compile_context>

<pallas_src>
import functools

import jax
import jax.numpy as jnp
from jax import lax
from jax.experimental import pallas as pl
from jax.experimental.pallas import tpu as pltpu


def _round_up(x, m):
    return ((x + m - 1) // m) * m


def _cdiv(a, b):
    return (a + b - 1) // b


def _vmem_limit_bytes():
    """Scoped-VMEM limit derived from the chip (v5e/v6e: 128 MiB, v7x: 64 MiB/TC)."""
    try:
        cap = int(pltpu.get_tpu_info().vmem_capacity_bytes)
    except Exception:          # conservative default if the query is unavailable
        cap = 64 << 20
    return min((cap * 3) // 4, 96 << 20)


# ---------------------------------------------------------------------------
# Kernel 1: routing (fc -> sigmoid) + expert-weight combine, tiled over the
# flattened weight axis N = K*K*C_out*C_in.
#   pooled_ref : (1, C_in)     f32   global-average-pooled input (resident)
#   fcwt_ref   : (C_in, E)     f32   routing fc weight, transposed (resident)
#   fcb_ref    : (1, E)        f32   routing fc bias (resident)
#   wstack_ref : (E, tile_n)   f32   per-expert weights, (kh,kw,o,ci)-major (streamed)
#   wflat_ref  : (1, tile_n)   bf16  combined weight tile (output, bf16 directly)
# ---------------------------------------------------------------------------
def _route_combine_kernel(pooled_ref, fcwt_ref, fcb_ref, wstack_ref, wflat_ref):
    # routing_func: Linear + sigmoid on the pooled vector (tiny, E*C_in flops;
    # recomputed per weight tile -- negligible).
    logits = jnp.dot(pooled_ref[...], fcwt_ref[...],
                     preferred_element_type=jnp.float32) + fcb_ref[...]
    r = jax.nn.sigmoid(logits)                                    # (1, E)
    # Combined conv weight  W = sum_e r_e * W_e  as one MXU contraction,
    # emitted directly in bf16 so no separate HBM cast pass is needed.
    wflat_ref[...] = jnp.dot(r, wstack_ref[...],
                             preferred_element_type=jnp.float32
                             ).astype(wflat_ref.dtype)


# ---------------------------------------------------------------------------
# Kernel 2 (stride == 1 fast path): conv as K*K tap matmuls accumulated
# in-kernel on the flattened padded-width grid.
#   w_ref   : (K*K, C_out, C_in)   bf16  resident weight (constant index map)
#   x_ref   : (C_in, band_cols)    bf16  streamed band of the flattened padded input
#   out_ref : (C_out, tile_m)      f32   lane-dense output tile
# ---------------------------------------------------------------------------
def _conv_taps_kernel(w_ref, x_ref, out_ref, *, ksize, wp, tile_m):
    for kh in range(ksize):
        for kw in range(ksize):
            d = kh * wp + kw                       # static tap offset into the band
            contrib = jnp.dot(w_ref[kh * ksize + kw], x_ref[:, d:d + tile_m],
                              preferred_element_type=jnp.float32)
            if kh == 0 and kw == 0:
                out_ref[...] = contrib
            else:
                out_ref[...] += contrib


# ---------------------------------------------------------------------------
# Kernel 2 (stride > 1 fallback): im2col matmul; patches streamed in f32 and
# cast to bf16 in-kernel (no separate pad/cast/crop passes).
# ---------------------------------------------------------------------------
def _conv_im2col_kernel(w_ref, p_ref, out_ref):
    out_ref[...] = jnp.dot(w_ref[...], p_ref[...].astype(jnp.bfloat16),
                           preferred_element_type=jnp.float32)


def _conv_stride1(x_chw, w_taps, *, K, O, padding, Hp, Wp, OH, OW, vmem_limit):
    C = x_chw.shape[0]
    K2 = K * K
    Mg = OH * Wp                           # output columns on the padded-width grid
    halo = (K - 1) * (Wp + 1)              # extra input columns needed by the last tap

    # ---- tile sizing from a per-chip VMEM budget ----
    per_col = 4 * C + 8 * O                # 2x bf16 input bufs + 2x f32 out bufs, per column
    fixed = 4 * K2 * O * C + 4 * C * halo  # 2x bf16 resident weight + halo part of input bufs
    # TODO(synk): if the combined weight (K*K*C_out*C_in bf16) ever exceeds VMEM,
    # add a reduction grid axis over taps/input channels with an accumulator scratch.
    budget = vmem_limit // 2
    tile_m = max(128, max(budget - fixed, 0) // max(per_col, 1))
    tile_m = max(128, (min(tile_m, 8192) // 128) * 128)
    # >= 4 grid steps when the problem is small, so each TensorCore of the
    # megacore split still gets >= 2 pipelined (overlapped) steps.
    tile_m = min(tile_m, max(128, _round_up(_cdiv(Mg, 4), 128)))
    if tile_m >= Mg:                       # tiny problem: one full-extent block
        tile_m = Mg
    nb = _cdiv(Mg, tile_m)
    band_cols = _round_up(tile_m + halo, 128)

    # ---- flatten + pad + cast + band-replicate the input (one cheap ~1.1x pass;
    #      this replaces the K^2-inflated im2col slab and its pad/cast passes) ----
    xf = jnp.pad(x_chw, ((0, 0), (padding, padding), (padding, padding)))
    xf = xf.reshape(C, Hp * Wp).astype(jnp.bfloat16)
    total_cols = (nb - 1) * tile_m + band_cols
    xf = jnp.pad(xf, ((0, 0), (0, total_cols - Hp * Wp)))
    starts = jnp.arange(nb, dtype=jnp.int32) * tile_m
    xb = jax.vmap(lambda s: lax.dynamic_slice(xf, (0, s), (C, band_cols)))(starts)

    out_g = pl.pallas_call(
        functools.partial(_conv_taps_kernel, ksize=K, wp=Wp, tile_m=tile_m),
        out_shape=jax.ShapeDtypeStruct((O, Mg), jnp.float32),
        grid=(nb,),
        in_specs=[
            pl.BlockSpec((K2, O, C), lambda i: (0, 0, 0)),            # resident bf16 weight
            pl.BlockSpec((None, C, band_cols), lambda i: (i, 0, 0)),  # streamed input band
            # TODO(synk): optionally sweep pipeline_mode=pl.Buffered(3) on the band spec.
        ],
        out_specs=pl.BlockSpec((O, tile_m), lambda i: (0, i)),        # lane-dense stores
        compiler_params=pltpu.CompilerParams(
            dimension_semantics=("parallel",),                        # megacore split
            vmem_limit_bytes=vmem_limit),
    )(w_taps, xb)

    # (C_out, OH, Wp) -> drop the padded-width garbage columns -> NCHW.
    return out_g.reshape(O, OH, Wp)[:, :, :OW][None]


def _conv_im2col(x_chw, w_taps, *, K, O, stride, padding, OH, OW, vmem_limit):
    # TODO(synk): stride > 1 fallback streams K^2x more bytes than the stride-1 path.
    C = x_chw.shape[0]
    K2 = K * K
    KKC = K2 * C
    M = OH * OW
    xpad = jnp.pad(x_chw, ((0, 0), (padding, padding), (padding, padding)))
    cols = []
    for kh in range(K):
        for kw in range(K):
            sl = lax.slice(xpad, (0, kh, kw),
                           (C, kh + (OH - 1) * stride + 1, kw + (OW - 1) * stride + 1),
                           (1, stride, stride))                    # (C, OH, OW)
            cols.append(sl.reshape(C, M))
    patches_t = jnp.concatenate(cols, axis=0)                      # (KKC, M) f32

    w2d = jnp.transpose(w_taps, (1, 0, 2)).reshape(O, KKC)         # (C_out, (kh,kw,ci)) bf16
    per_col = 8 * KKC + 8 * O                                      # f32 patches + f32 out, x2 bufs
    tile_m = max(128, (min((vmem_limit // 2) // max(per_col, 1), 8192) // 128) * 128)
    if tile_m >= M:
        tile_m = M
    out = pl.pallas_call(
        _conv_im2col_kernel,
        out_shape=jax.ShapeDtypeStruct((O, M), jnp.float32),
        grid=(_cdiv(M, tile_m),),
        in_specs=[
            pl.BlockSpec((O, KKC), lambda i: (0, 0)),
            pl.BlockSpec((KKC, tile_m), lambda i: (0, i)),
        ],
        out_specs=pl.BlockSpec((O, tile_m), lambda i: (0, i)),
        compiler_params=pltpu.CompilerParams(
            dimension_semantics=("parallel",),
            vmem_limit_bytes=vmem_limit),
    )(w2d, patches_t)
    return out.reshape(O, OH, OW)[None]


def make_condconv_inf(expert_weights, fc_w, fc_b, *, stride=1, padding=0, groups=1):
    """Builds the CondConv_Inf forward fn.  Model-load-time prep (expert-stack
    transpose, fc transpose) happens once here, not per forward call."""
    if groups != 1:
        raise NotImplementedError  # TODO(synk): grouped convolution (default groups=1)
    E, O, I, K, K2_ = expert_weights.shape
    assert K == K2_
    K2 = K * K
    N = K2 * O * I

    # (E, O, I, K, K) -> (E, K, K, O, I) -> (E, K*K*O*I): tap-major so the
    # combined weight reshapes straight to (K*K, C_out, C_in).
    wstack_flat = jnp.transpose(jnp.asarray(expert_weights, jnp.float32),
                                (0, 3, 4, 1, 2)).reshape(E, N)
    fcwt = jnp.asarray(fc_w, jnp.float32).T                        # (C_in, E)
    fcb = jnp.asarray(fc_b, jnp.float32).reshape(1, E)
    vmem_limit = _vmem_limit_bytes()

    def forward(x):
        B, C, H, W = x.shape
        assert B == 1, "CondConv_Inf broadcast (weight * route) is only valid for batch == 1"
        assert C == I
        OH = (H + 2 * padding - K) // stride + 1
        OW = (W + 2 * padding - K) // stride + 1
        Hp, Wp = H + 2 * padding, W + 2 * padding

        # Global average pool: trivial full reduction, done in plain JAX so the
        # feature map never has to be resident in VMEM just to take a mean.
        pooled = jnp.mean(x[0].astype(jnp.float32), axis=(1, 2)).reshape(1, C)

        # ---- kernel 1: routing + expert combine, tiled over the weight axis ----
        tile_n = N if N <= 8192 else 8192
        wflat = pl.pallas_call(
            _route_combine_kernel,
            out_shape=jax.ShapeDtypeStruct((1, N), jnp.bfloat16),
            grid=(_cdiv(N, tile_n),),
            in_specs=[
                pl.BlockSpec((1, C), lambda n: (0, 0)),
                pl.BlockSpec((C, E), lambda n: (0, 0)),
                pl.BlockSpec((1, E), lambda n: (0, 0)),
                pl.BlockSpec((E, tile_n), lambda n: (0, n)),
            ],
            out_specs=pl.BlockSpec((1, tile_n), lambda n: (0, n)),
            compiler_params=pltpu.CompilerParams(
                dimension_semantics=("parallel",),
                vmem_limit_bytes=vmem_limit),
        )(pooled, fcwt, fcb, wstack_flat)
        w_taps = wflat.reshape(K2, O, C)                           # (K*K, C_out, C_in) bf16

        x_chw = x[0].astype(jnp.float32)
        if stride == 1:
            return _conv_stride1(x_chw, w_taps, K=K, O=O, padding=padding,
                                 Hp=Hp, Wp=Wp, OH=OH, OW=OW, vmem_limit=vmem_limit)
        return _conv_im2col(x_chw, w_taps, K=K, O=O, stride=stride, padding=padding,
                            OH=OH, OW=OW, vmem_limit=vmem_limit)

    return jax.jit(forward)


if __name__ == "__main__":
    key = jax.random.PRNGKey(0)
    B, C_in, C_out, K, E, H, W = 1, 8, 16, 3, 3, 16, 16
    stride, padding = 1, 1

    k1, k2, k3, k4 = jax.random.split(key, 4)
    x = jax.random.normal(k1, (B, C_in, H, W), jnp.float32)
    expert_w = jax.random.normal(k2, (E, C_out, C_in, K, K), jnp.float32) * 0.1
    fc_w = jax.random.normal(k3, (E, C_in), jnp.float32) * 0.1
    fc_b = jax.random.normal(k4, (E,), jnp.float32) * 0.1

    fwd = make_condconv_inf(expert_w, fc_w, fc_b, stride=stride, padding=padding)
    out = jax.block_until_ready(fwd(x))

    # plain-JAX reference (same math as the PyTorch module, batch == 1), with the
    # same bf16-operand / f32-accumulate convolution precision as the kernel.
    pooled = jnp.mean(x, axis=(2, 3))                                     # (1, C_in)
    r = jax.nn.sigmoid(pooled @ fc_w.T + fc_b)                            # (1, E)
    comb = jnp.einsum('e,eoikl->oikl', r[0], expert_w)                    # (O, I, K, K)
    ref = lax.conv_general_dilated(
        x.astype(jnp.bfloat16), comb.astype(jnp.bfloat16),
        window_strides=(stride, stride),
        padding=[(padding, padding), (padding, padding)],
        dimension_numbers=('NCHW', 'OIHW', 'NCHW'),
        preferred_element_type=jnp.float32)

    assert out.shape == ref.shape, (out.shape, ref.shape)
    err = float(jnp.max(jnp.abs(out - ref)))
    assert jnp.allclose(out, ref, atol=3e-3, rtol=3e-3), f"max abs err {err}"
    print("KERNEL_OK")
</pallas_src>

<mosaic_0001>
module attributes {stable_mosaic.version = 11 : i64} {
  func.func @_route_combine_kernel(%arg0: i32, %arg1: memref<1x8xf32, #tpu.memory_space<vmem>>, %arg2: memref<8x3xf32, #tpu.memory_space<vmem>>, %arg3: memref<1x3xf32, #tpu.memory_space<vmem>>, %arg4: memref<3x1152xf32, #tpu.memory_space<vmem>>, %arg5: memref<1x1152xbf16, #tpu.memory_space<vmem>>) attributes {dimension_semantics = [#tpu.dimension_semantics<parallel>], iteration_bounds = array<i64: 1>, scalar_prefetch = 0 : i64, scratch_operands = 0 : i64, tpu.core_type = #tpu.core_type<tc>, window_params = [{pipeline_mode = #tpu.pipeline_mode<synchronous>, transform_indices = @transform_0, window_bounds = array<i64: 1, 8>}, {pipeline_mode = #tpu.pipeline_mode<synchronous>, transform_indices = @transform_1, window_bounds = array<i64: 8, 3>}, {pipeline_mode = #tpu.pipeline_mode<synchronous>, transform_indices = @transform_2, window_bounds = array<i64: 1, 3>}, {transform_indices = @transform_3, window_bounds = array<i64: 3, 1152>}, {transform_indices = @transform_4, window_bounds = array<i64: 1, 1152>}]} {
    %c0 = arith.constant 0 : index
    %c0_0 = arith.constant 0 : index
    %0 = vector.load %arg1[%c0, %c0_0] : memref<1x8xf32, #tpu.memory_space<vmem>>, vector<1x8xf32>
    %c0_1 = arith.constant 0 : index
    %c0_2 = arith.constant 0 : index
    %1 = vector.load %arg2[%c0_1, %c0_2] : memref<8x3xf32, #tpu.memory_space<vmem>>, vector<8x3xf32>
    %cst = arith.constant dense<0.000000e+00> : vector<1x3xf32>
    %2 = tpu.matmul %0, %1, %cst {dimension_numbers = #tpu.dot_dimension_numbers<[1], [0], [0], [1], [0, 0, 1, 1], [], []>} : vector<1x8xf32>, vector<8x3xf32>, vector<1x3xf32> -> vector<1x3xf32>
    %c0_3 = arith.constant 0 : index
    %c0_4 = arith.constant 0 : index
    %3 = vector.load %arg3[%c0_3, %c0_4] : memref<1x3xf32, #tpu.memory_space<vmem>>, vector<1x3xf32>
    %4 = arith.addf %2, %3 : vector<1x3xf32>
    %5 = arith.negf %4 : vector<1x3xf32>
    %6 = math.exp %5 : vector<1x3xf32>
    %cst_5 = arith.constant 1.000000e+00 : f32
    %7 = vector.broadcast %cst_5 : f32 to vector<1x3xf32>
    %8 = arith.addf %7, %6 : vector<1x3xf32>
    %9 = arith.divf %7, %8 : vector<1x3xf32>
    %c0_6 = arith.constant 0 : index
    %c0_7 = arith.constant 0 : index
    %10 = vector.load %arg4[%c0_6, %c0_7] : memref<3x1152xf32, #tpu.memory_space<vmem>>, vector<3x1152xf32>
    %cst_8 = arith.constant dense<0.000000e+00> : vector<1x1152xf32>
    %11 = tpu.matmul %9, %10, %cst_8 {dimension_numbers = #tpu.dot_dimension_numbers<[1], [0], [0], [1], [0, 0, 1, 1], [], []>} : vector<1x3xf32>, vector<3x1152xf32>, vector<1x1152xf32> -> vector<1x1152xf32>
    %12 = arith.truncf %11 : vector<1x1152xf32> to vector<1x1152xbf16>
    %c0_9 = arith.constant 0 : index
    %c0_10 = arith.constant 0 : index
    %13 = vector.load %arg5[%c0_9, %c0_10] : memref<1x1152xbf16, #tpu.memory_space<vmem>>, vector<1x1152xbf16>
    tpu.vector_store %arg5[%c0_9, %c0_10], %12 {strides = array<i32>} : memref<1x1152xbf16, #tpu.memory_space<vmem>>, vector<1x1152xbf16>,
    return
  }
  func.func @transform_0(%arg0: i32) -> (i32, i32) {
    %c0_i32 = arith.constant 0 : i32
    %c0_i32_0 = arith.constant 0 : i32
    %c0_i32_1 = arith.constant 0 : i32
    return %c0_i32, %c0_i32_0 : i32, i32
  }
  func.func @transform_1(%arg0: i32) -> (i32, i32) {
    %c0_i32 = arith.constant 0 : i32
    %c0_i32_0 = arith.constant 0 : i32
    %c0_i32_1 = arith.constant 0 : i32
    return %c0_i32, %c0_i32_0 : i32, i32
  }
  func.func @transform_2(%arg0: i32) -> (i32, i32) {
    %c0_i32 = arith.constant 0 : i32
    %c0_i32_0 = arith.constant 0 : i32
    %c0_i32_1 = arith.constant 0 : i32
    return %c0_i32, %c0_i32_0 : i32, i32
  }
  func.func @transform_3(%arg0: i32) -> (i32, i32) {
    %c0_i32 = arith.constant 0 : i32
    %c0_i32_0 = arith.constant 0 : i32
    return %c0_i32, %arg0 : i32, i32
  }
  func.func @transform_4(%arg0: i32) -> (i32, i32) {
    %c0_i32 = arith.constant 0 : i32
    %c0_i32_0 = arith.constant 0 : i32
    return %c0_i32, %arg0 : i32, i32
  }
}

module attributes {stable_mosaic.version = 11 : i64} {
  func.func @_conv_taps_kernel(%arg0: i32, %arg1: memref<9x16x8xbf16, #tpu.memory_space<vmem>>, %arg2: memref<1x8x256xbf16, #tpu.memory_space<vmem>>, %arg3: memref<16x128xf32, #tpu.memory_space<vmem>>) attributes {dimension_semantics = [#tpu.dimension_semantics<parallel>], iteration_bounds = array<i64: 3>, scalar_prefetch = 0 : i64, scratch_operands = 0 : i64, tpu.core_type = #tpu.core_type<tc>, window_params = [{pipeline_mode = #tpu.pipeline_mode<synchronous>, transform_indices = @transform_0, window_bounds = array<i64: 9, 16, 8>}, {transform_indices = @transform_1, window_bounds = array<i64: 1, 8, 256>}, {transform_indices = @transform_2, window_bounds = array<i64: 16, 128>}]} {
    %c0 = arith.constant 0 : index
    %c0_0 = arith.constant 0 : index
    %c0_1 = arith.constant 0 : index
    %0 = vector.load %arg1[%c0, %c0_0, %c0_1] : memref<9x16x8xbf16, #tpu.memory_space<vmem>>, vector<1x16x8xbf16>
    %1 = vector.shape_cast %0 : vector<1x16x8xbf16> to vector<16x8xbf16>
    %c0_2 = arith.constant 0 : index
    %c0_3 = arith.constant 0 : index
    %c0_4 = arith.constant 0 : index
    %2 = vector.load %arg2[%c0_2, %c0_3, %c0_4] : memref<1x8x256xbf16, #tpu.memory_space<vmem>>, vector<1x8x128xbf16>
    %3 = vector.shape_cast %2 : vector<1x8x128xbf16> to vector<8x128xbf16>
    %cst = arith.constant dense<0.000000e+00> : vector<16x128xf32>
    %4 = tpu.matmul %1, %3, %cst {dimension_numbers = #tpu.dot_dimension_numbers<[1], [0], [0], [1], [0, 0, 1, 1], [], []>} : vector<16x8xbf16>, vector<8x128xbf16>, vector<16x128xf32> -> vector<16x128xf32>
    %c0_5 = arith.constant 0 : index
    %c0_6 = arith.constant 0 : index
    %5 = vector.load %arg3[%c0_5, %c0_6] : memref<16x128xf32, #tpu.memory_space<vmem>>, vector<16x128xf32>
    tpu.vector_store %arg3[%c0_5, %c0_6], %4 {strides = array<i32>} : memref<16x128xf32, #tpu.memory_space<vmem>>, vector<16x128xf32>,
    %c1 = arith.constant 1 : index
    %c0_7 = arith.constant 0 : index
    %c0_8 = arith.constant 0 : index
    %6 = vector.load %arg1[%c1, %c0_7, %c0_8] : memref<9x16x8xbf16, #tpu.memory_space<vmem>>, vector<1x16x8xbf16>
    %7 = vector.shape_cast %6 : vector<1x16x8xbf16> to vector<16x8xbf16>
    %c0_9 = arith.constant 0 : index
    %c0_10 = arith.constant 0 : index
    %c1_11 = arith.constant 1 : index
    %8 = vector.load %arg2[%c0_9, %c0_10, %c1_11] : memref<1x8x256xbf16, #tpu.memory_space<vmem>>, vector<1x8x128xbf16>
    %9 = vector.shape_cast %8 : vector<1x8x128xbf16> to vector<8x128xbf16>
    %cst_12 = arith.constant dense<0.000000e+00> : vector<16x128xf32>
    %10 = tpu.matmul %7, %9, %cst_12 {dimension_numbers = #tpu.dot_dimension_numbers<[1], [0], [0], [1], [0, 0, 1, 1], [], []>} : vector<16x8xbf16>, vector<8x128xbf16>, vector<16x128xf32> -> vector<16x128xf32>
    %c0_13 = arith.constant 0 : index
    %c0_14 = arith.constant 0 : index
    %11 = vector.load %arg3[%c0_13, %c0_14] : memref<16x128xf32, #tpu.memory_space<vmem>>, vector<16x128xf32>
    %12 = arith.addf %11, %10 : vector<16x128xf32>
    %c0_15 = arith.constant 0 : index
    %c0_16 = arith.constant 0 : index
    %13 = vector.load %arg3[%c0_15, %c0_16] : memref<16x128xf32, #tpu.memory_space<vmem>>, vector<16x128xf32>
    tpu.vector_store %arg3[%c0_15, %c0_16], %12 {strides = array<i32>} : memref<16x128xf32, #tpu.memory_space<vmem>>, vector<16x128xf32>,
    %c2 = arith.constant 2 : index
    %c0_17 = arith.constant 0 : index
    %c0_18 = arith.constant 0 : index
    %14 = vector.load %arg1[%c2, %c0_17, %c0_18] : memref<9x16x8xbf16, #tpu.memory_space<vmem>>, vector<1x16x8xbf16>
    %15 = vector.shape_cast %14 : vector<1x16x8xbf16> to vector<16x8xbf16>
    %c0_19 = arith.constant 0 : index
    %c0_20 = arith.constant 0 : index
    %c2_21 = arith.constant 2 : index
    %16 = vector.load %arg2[%c0_19, %c0_20, %c2_21] : memref<1x8x256xbf16, #tpu.memory_space<vmem>>, vector<1x8x128xbf16>
    %17 = vector.shape_cast %16 : vector<1x8x128xbf16> to vector<8x128xbf16>
    %cst_22 = arith.constant dense<0.000000e+00> : vector<16x128xf32>
    %18 = tpu.matmul %15, %17, %cst_22 {dimension_numbers = #tpu.dot_dimension_numbers<[1], [0], [0], [1], [0, 0, 1, 1], [], []>} : vector<16x8xbf16>, vector<8x128xbf16>, vector<16x128xf32> -> vector<16x128xf32>
    %c0_23 = arith.constant 0 : index
    %c0_24 = arith.constant 0 : index
    %19 = vector.load %arg3[%c0_23, %c0_24] : memref<16x128xf32, #tpu.memory_space<vmem>>, vector<16x128xf32>
    %20 = arith.addf %19, %18 : vector<16x128xf32>
    %c0_25 = arith.constant 0 : index
    %c0_26 = arith.constant 0 : index
    %21 = vector.load %arg3[%c0_25, %c0_26] : memref<16x128xf32, #tpu.memory_space<vmem>>, vector<16x128xf32>
    tpu.vector_store %arg3[%c0_25, %c0_26], %20 {strides = array<i32>} : memref<16x128xf32, #tpu.memory_space<vmem>>, vector<16x128xf32>,
    %c3 = arith.constant 3 : index
    %c0_27 = arith.constant 0 : index
    %c0_28 = arith.constant 0 : index
    %22 = vector.load %arg1[%c3, %c0_27, %c0_28] : memref<9x16x8xbf16, #tpu.memory_space<vmem>>, vector<1x16x8xbf16>
    %23 = vector.shape_cast %22 : vector<1x16x8xbf16> to vector<16x8xbf16>
    %c0_29 = arith.constant 0 : index
    %c0_30 = arith.constant 0 : index
    %c18 = arith.constant 18 : index
    %24 = vector.load %arg2[%c0_29, %c0_30, %c18] : memref<1x8x256xbf16, #tpu.memory_space<vmem>>, vector<1x8x128xbf16>
    %25 = vector.shape_cast %24 : vector<1x8x128xbf16> to vector<8x128xbf16>
    %cst_31 = arith.constant dense<0.000000e+00> : vector<16x128xf32>
    %26 = tpu.matmul %23, %25, %cst_31 {dimension_numbers = #tpu.dot_dimension_numbers<[1], [0], [0], [1], [0, 0, 1, 1], [], []>} : vector<16x8xbf16>, vector<8x128xbf16>, vector<16x128xf32> -> vector<16x128xf32>
    %c0_32 = arith.constant 0 : index
    %c0_33 = arith.constant 0 : index
    %27 = vector.load %arg3[%c0_32, %c0_33] : memref<16x128xf32, #tpu.memory_space<vmem>>, vector<16x128xf32>
    %28 = arith.addf %27, %26 : vector<16x128xf32>
    %c0_34 = arith.constant 0 : index
    %c0_35 = arith.constant 0 : index
    %29 = vector.load %arg3[%c0_34, %c0_35] : memref<16x128xf32, #tpu.memory_space<vmem>>, vector<16x128xf32>
    tpu.vector_store %arg3[%c0_34, %c0_35], %28 {strides = array<i32>} : memref<16x128xf32, #tpu.memory_space<vmem>>, vector<16x128xf32>,
    %c4 = arith.constant 4 : index
    %c0_36 = arith.constant 0 : index
    %c0_37 = arith.constant 0 : index
    %30 = vector.load %arg1[%c4, %c0_36, %c0_37] : memref<9x16x8xbf16, #tpu.memory_space<vmem>>, vector<1x16x8xbf16>
    %31 = vector.shape_cast %30 : vector<1x16x8xbf16> to vector<16x8xbf16>
    %c0_38 = arith.constant 0 : index
    %c0_39 = arith.constant 0 : index
    %c19 = arith.constant 19 : index
    %32 = vector.load %arg2[%c0_38, %c0_39, %c19] : memref<1x8x256xbf16, #tpu.memory_space<vmem>>, vector<1x8x128xbf16>
    %33 = vector.shape_cast %32 : vector<1x8x128xbf16> to vector<8x128xbf16>
    %cst_40 = arith.constant dense<0.000000e+00> : vector<16x128xf32>
    %34 = tpu.matmul %31, %33, %cst_40 {dimension_numbers = #tpu.dot_dimension_numbers<[1], [0], [0], [1], [0, 0, 1, 1], [], []>} : vector<16x8xbf16>, vector<8x128xbf16>, vector<16x128xf32> -> vector<16x128xf32>
    %c0_41 = arith.constant 0 : index
    %c0_42 = arith.constant 0 : index
    %35 = vector.load %arg3[%c0_41, %c0_42] : memref<16x128xf32, #tpu.memory_space<vmem>>, vector<16x128xf32>
    %36 = arith.addf %35, %34 : vector<16x128xf32>
    %c0_43 = arith.constant 0 : index
    %c0_44 = arith.constant 0 : index
    %37 = vector.load %arg3[%c0_43, %c0_44] : memref<16x128xf32, #tpu.memory_space<vmem>>, vector<16x128xf32>
    tpu.vector_store %arg3[%c0_43, %c0_44], %36 {strides = array<i32>} : memref<16x128xf32, #tpu.memory_space<vmem>>, vector<16x128xf32>,
    %c5 = arith.constant 5 : index
    %c0_45 = arith.constant 0 : index
    %c0_46 = arith.constant 0 : index
    %38 = vector.load %arg1[%c5, %c0_45, %c0_46] : memref<9x16x8xbf16, #tpu.memory_space<vmem>>, vector<1x16x8xbf16>
    %39 = vector.shape_cast %38 : vector<1x16x8xbf16> to vector<16x8xbf16>
    %c0_47 = arith.constant 0 : index
    %c0_48 = arith.constant 0 : index
    %c20 = arith.constant 20 : index
    %40 = vector.load %arg2[%c0_47, %c0_48, %c20] : memref<1x8x256xbf16, #tpu.memory_space<vmem>>, vector<1x8x128xbf16>
    %41 = vector.shape_cast %40 : vector<1x8x128xbf16> to vector<8x128xbf16>
    %cst_49 = arith.constant dense<0.000000e+00> : vector<16x128xf32>
    %42 = tpu.matmul %39, %41, %cst_49 {dimension_numbers = #tpu.dot_dimension_numbers<[1], [0], [0], [1], [0, 0, 1, 1], [], []>} : vector<16x8xbf16>, vector<8x128xbf16>, vector<16x128xf32> -> vector<16x128xf32>
    %c0_50 = arith.constant 0 : index
    %c0_51 = arith.constant 0 : index
    %43 = vector.load %arg3[%c0_50, %c0_51] : memref<16x128xf32, #tpu.memory_space<vmem>>, vector<16x128xf32>
    %44 = arith.addf %43, %42 : vector<16x128xf32>
    %c0_52 = arith.constant 0 : index
    %c0_53 = arith.constant 0 : index
    %45 = vector.load %arg3[%c0_52, %c0_53] : memref<16x128xf32, #tpu.memory_space<vmem>>, vector<16x128xf32>
    tpu.vector_store %arg3[%c0_52, %c0_53], %44 {strides = array<i32>} : memref<16x128xf32, #tpu.memory_space<vmem>>, vector<16x128xf32>,
    %c6 = arith.constant 6 : index
    %c0_54 = arith.constant 0 : index
    %c0_55 = arith.constant 0 : index
    %46 = vector.load %arg1[%c6, %c0_54, %c0_55] : memref<9x16x8xbf16, #tpu.memory_space<vmem>>, vector<1x16x8xbf16>
    %47 = vector.shape_cast %46 : vector<1x16x8xbf16> to vector<16x8xbf16>
    %c0_56 = arith.constant 0 : index
    %c0_57 = arith.constant 0 : index
    %c36 = arith.constant 36 : index
    %48 = vector.load %arg2[%c0_56, %c0_57, %c36] : memref<1x8x256xbf16, #tpu.memory_space<vmem>>, vector<1x8x128xbf16>
    %49 = vector.shape_cast %48 : vector<1x8x128xbf16> to vector<8x128xbf16>
    %cst_58 = arith.constant dense<0.000000e+00> : vector<16x128xf32>
    %50 = tpu.matmul %47, %49, %cst_58 {dimension_numbers = #tpu.dot_dimension_numbers<[1], [0], [0], [1], [0, 0, 1, 1], [], []>} : vector<16x8xbf16>, vector<8x128xbf16>, vector<16x128xf32> -> vector<16x128xf32>
    %c0_59 = arith.constant 0 : index
    %c0_60 = arith.constant 0 : index
    %51 = vector.load %arg3[%c0_59, %c0_60] : memref<16x128xf32, #tpu.memory_space<vmem>>, vector<16x128xf32>
    %52 = arith.addf %51, %50 : vector<16x128xf32>
    %c0_61 = arith.constant 0 : index
    %c0_62 = arith.constant 0 : index
    %53 = vector.load %arg3[%c0_61, %c0_62] : memref<16x128xf32, #tpu.memory_space<vmem>>, vector<16x128xf32>
    tpu.vector_store %arg3[%c0_61, %c0_62], %52 {strides = array<i32>} : memref<16x128xf32, #tpu.memory_space<vmem>>, vector<16x128xf32>,
    %c7 = arith.constant 7 : index
    %c0_63 = arith.constant 0 : index
    %c0_64 = arith.constant 0 : index
    %54 = vector.load %arg1[%c7, %c0_63, %c0_64] : memref<9x16x8xbf16, #tpu.memory_space<vmem>>, vector<1x16x8xbf16>
    %55 = vector.shape_cast %54 : vector<1x16x8xbf16> to vector<16x8xbf16>
    %c0_65 = arith.constant 0 : index
    %c0_66 = arith.constant 0 : index
    %c37 = arith.constant 37 : index
    %56 = vector.load %arg2[%c0_65, %c0_66, %c37] : memref<1x8x256xbf16, #tpu.memory_space<vmem>>, vector<1x8x128xbf16>
    %57 = vector.shape_cast %56 : vector<1x8x128xbf16> to vector<8x128xbf16>
    %cst_67 = arith.constant dense<0.000000e+00> : vector<16x128xf32>
    %58 = tpu.matmul %55, %57, %cst_67 {dimension_numbers = #tpu.dot_dimension_numbers<[1], [0], [0], [1], [0, 0, 1, 1], [], []>} : vector<16x8xbf16>, vector<8x128xbf16>, vector<16x128xf32> -> vector<16x128xf32>
    %c0_68 = arith.constant 0 : index
    %c0_69 = arith.constant 0 : index
    %59 = vector.load %arg3[%c0_68, %c0_69] : memref<16x128xf32, #tpu.memory_space<vmem>>, vector<16x128xf32>
    %60 = arith.addf %59, %58 : vector<16x128xf32>
    %c0_70 = arith.constant 0 : index
    %c0_71 = arith.constant 0 : index
    %61 = vector.load %arg3[%c0_70, %c0_71] : memref<16x128xf32, #tpu.memory_space<vmem>>, vector<16x128xf32>
    tpu.vector_store %arg3[%c0_70, %c0_71], %60 {strides = array<i32>} : memref<16x128xf32, #tpu.memory_space<vmem>>, vector<16x128xf32>,
    %c8 = arith.constant 8 : index
    %c0_72 = arith.constant 0 : index
    %c0_73 = arith.constant 0 : index
    %62 = vector.load %arg1[%c8, %c0_72, %c0_73] : memref<9x16x8xbf16, #tpu.memory_space<vmem>>, vector<1x16x8xbf16>
    %63 = vector.shape_cast %62 : vector<1x16x8xbf16> to vector<16x8xbf16>
    %c0_74 = arith.constant 0 : index
    %c0_75 = arith.constant 0 : index
    %c38 = arith.constant 38 : index
    %64 = vector.load %arg2[%c0_74, %c0_75, %c38] : memref<1x8x256xbf16, #tpu.memory_space<vmem>>, vector<1x8x128xbf16>
    %65 = vector.shape_cast %64 : vector<1x8x128xbf16> to vector<8x128xbf16>
    %cst_76 = arith.constant dense<0.000000e+00> : vector<16x128xf32>
    %66 = tpu.matmul %63, %65, %cst_76 {dimension_numbers = #tpu.dot_dimension_numbers<[1], [0], [0], [1], [0, 0, 1, 1], [], []>} : vector<16x8xbf16>, vector<8x128xbf16>, vector<16x128xf32> -> vector<16x128xf32>
    %c0_77 = arith.constant 0 : index
    %c0_78 = arith.constant 0 : index
    %67 = vector.load %arg3[%c0_77, %c0_78] : memref<16x128xf32, #tpu.memory_space<vmem>>, vector<16x128xf32>
    %68 = arith.addf %67, %66 : vector<16x128xf32>
    %c0_79 = arith.constant 0 : index
    %c0_80 = arith.constant 0 : index
    %69 = vector.load %arg3[%c0_79, %c0_80] : memref<16x128xf32, #tpu.memory_space<vmem>>, vector<16x128xf32>
    tpu.vector_store %arg3[%c0_79, %c0_80], %68 {strides = array<i32>} : memref<16x128xf32, #tpu.memory_space<vmem>>, vector<16x128xf32>,
    return
  }
  func.func @transform_0(%arg0: i32) -> (i32, i32, i32) {
    %c0_i32 = arith.constant 0 : i32
    %c0_i32_0 = arith.constant 0 : i32
    %c0_i32_1 = arith.constant 0 : i32
    %c0_i32_2 = arith.constant 0 : i32
    return %c0_i32, %c0_i32_0, %c0_i32_1 : i32, i32, i32
  }
  func.func @transform_1(%arg0: i32) -> (i32, i32, i32) {
    %c0_i32 = arith.constant 0 : i32
    %c0_i32_0 = arith.constant 0 : i32
    %c0_i32_1 = arith.constant 0 : i32
    return %arg0, %c0_i32, %c0_i32_0 : i32, i32, i32
  }
  func.func @transform_2(%arg0: i32) -> (i32, i32) {
    %c0_i32 = arith.constant 0 : i32
    %c0_i32_0 = arith.constant 0 : i32
    return %c0_i32, %arg0 : i32, i32
  }
}

</mosaic_0001>

<llo_original>
// kernel: custom-call
$region0: #{custom-call}
  %s0 = inlined_call_operand.vmem [shape: bf16[3,8,256], index: 0, kind: output, shape index: {}]

// kernel: forward.2
$region0: #{forward.2}
  #allocation0 [shape = 'u32[]', space=smem, size = 0x4, offset = 0x4, fixed_abs, tag = 'smem constant byte address 0x4 - core index']
  #allocation1 [shape = 'u32[72,128]{1,0:T(1,128)}', space=vmem, size = 0x9000, scoped, tag = 'internal scratch']
  %s0 = inlined_call_operand.vmem [shape: f32[1,8], index: 0, kind: input, shape index: {}]
  %s1 = inlined_call_operand.vmem [shape: f32[8,3], index: 1, kind: input, shape index: {}]
  %s2 = inlined_call_operand.vmem [shape: f32[1,3], index: 2, kind: input, shape index: {}]
  %s3 = inlined_call_operand.vmem [shape: f32[3,1152], index: 3, kind: input, shape index: {}]
  %s4 = inlined_call_operand.vmem [shape: bf16[1,1152], index: 4, kind: output, shape index: {}]
  %s5 = sld [smem:[#allocation0]]
  $region26: #{forward.2} parent=0
    _
  %s7 = ssub.s32 1, %s5
  %s8 = scalar_select 0, %s7, %s5
  // Predicated region
  $region2: #{forward.2} parent=0 // pred_check
    _
  $region3: #{forward.2} parent=0 // pred_check_branch
    %10 = sbr.rel (0) target = $region5
  $region4: #{forward.2} parent=0 // pred_region
    _
  $region5: #{forward.2} parent=0 // pred_fallthru
    _
  // Predicated region
  $region6: #{forward.2} parent=0 // pred_check
    _
  $region7: #{forward.2} parent=0 // pred_check_branch
    %12 = sbr.rel (0) target = $region9
  $region8: #{forward.2} parent=0 // pred_region
    _
  $region9: #{forward.2} parent=0 // pred_fallthru
    _
  // Predicated region
  $region10: #{forward.2} parent=0 // pred_check
    _
  $region11: #{forward.2} parent=0 // pred_check_branch
    %14 = sbr.rel (0) target = $region13
  $region12: #{forward.2} parent=0 // pred_region
    _
  $region13: #{forward.2} parent=0 // pred_fallthru
    _
  // Predicated region
  $region14: #{forward.2} parent=0 // pred_check
    _
  $region15: #{forward.2} parent=0 // pred_check_branch
    %16 = sbr.rel (0) target = $region17
  $region16: #{forward.2} parent=0 // pred_region
    _
  $region17: #{forward.2} parent=0 // pred_fallthru
    _
  %v17 = vld [vmem:[%s0] sm:$0x1]
  %v18 = vld [vmem:[%s1] sm:$0xff]
  %v19 = vld [vmem:[%s2] sm:$0x1]
  %vm20 = vcmask 64512
  %v22 = vsel %vm20, %v17, 0
  %24 = vmatpush.msra.mxu0 0.0
  %25 = vmatpush.msra.mxu0 0.0
  %26 = vmatpush.msra.mxu0 0.0
  %27 = vmatpush.msra.mxu0 0.0
  %28 = vmatpush.msra.mxu0 0.0
  %29 = vmatpush.msra.mxu0 0.0
  %30 = vmatpush.msra.mxu0 0.0
  %31 = vmatpush.msra.mxu0 0.0
  %32 = vmatpush.msra.mxu0 0.0
  %33 = vmatpush.msra.mxu0 0.0
  %34 = vmatpush.msra.mxu0 0.0
  %35 = vmatpush.msra.mxu0 0.0
  %36 = vmatpush.msra.mxu0 0.0
  %37 = vmatpush.msra.mxu0 0.0
  %38 = vmatpush.msra.mxu0 0.0
  %39 = vmatpush.msra.mxu0 %v18
  %40 = vmatmul.f32.gmra.mxu0 %v22
  %v41 = vpop.f32.mrf.mxu0
  %v42 = vadd.f32 %v19, %v41
  %43 = vdwg.mxu0
  %v44 = vxor.u32 %v42, 2147483648
  %v45 = vmul.f32 %v44, 1.442695
  %v46 = vpow.pop %v45
  %v47 = vadd.f32 %v46, 1.0
  %v48 = vrcp.pop %v47
  %v49 = vmul.f32 %v47, %v48
  %v50 = vsub.f32 1.0, %v49
  %v51 = vmul.f32 %v48, %v50
  %v52 = vadd.f32 %v48, %v51
  %vm53 = vweird.f32 %v47
  %vm54 = vweird.f32 %v48
  %vm55 = vmor %vm53, %vm54
  %v56 = vsel %vm55, %v48, %v52
  %v57 = vand.u32 2147483647, %v47
  %vm58 = vcmp.eq.f32.partialorder %v57, 8.507059e+37
  %v59 = vand.u32 %v47, 2147483648
  %v60 = vor.u32 1.1754944e-38, %v59
  %v61 = vsel %vm58, %v60, %v56
  %v62 = vmul.f32 1.0, %v61
  %v63 = vld [vmem:[%s3] sm:$0x77]
  %v64 = vld [vmem:[%s3 + $0x8] sm:$0x77]
  %v65 = vld [vmem:[%s3 + $0x10] sm:$0x77]
  %v66 = vld [vmem:[%s3 + $0x18] sm:$0x77]
  %v67 = vld [vmem:[%s3 + $0x20] sm:$0x7]
  %73 = vst [vmem:[#allocation1] ss:$2 sm:$0xff] %v63
  %s74 = scalar_lea.vmem [#allocation1], 16
  %75 = vst [vmem:[%s74] ss:$2 sm:$0xff] %v64
  %s76 = scalar_lea.vmem [#allocation1], 32
  %77 = vst [vmem:[%s76] ss:$2 sm:$0xff] %v65
  %s78 = scalar_lea.vmem [#allocation1], 48
  %79 = vst [vmem:[%s78] ss:$2 sm:$0xff] %v66
  %v80 = vld.sshfl [vmem:[#allocation1] sm:$0xff pattern:$0x75316420]
  %v81 = vld.sshfl [vmem:[#allocation1 + $0x8] sm:$0xff pattern:$0x75316420]
  %v82 = vld.sshfl [vmem:[#allocation1 + $0x10] sm:$0xff pattern:$0x75316420]
  %v83 = vld.sshfl [vmem:[#allocation1 + $0x18] sm:$0xff pattern:$0x75316420]
  %v84 = vld.sshfl [vmem:[#allocation1 + $0x20] sm:$0xff pattern:$0x75316420]
  %v85 = vld.sshfl [vmem:[#allocation1 + $0x28] sm:$0xff pattern:$0x75316420]
  %v86 = vld.sshfl [vmem:[#allocation1 + $0x30] sm:$0xff pattern:$0x75316420]
  %v87 = vld.sshfl [vmem:[#allocation1 + $0x38] sm:$0xff pattern:$0x75316420]
  %88 = vst [vmem:[#allocation1] ss:$2 sm:$0xff] %v67
  %v89 = vld.sshfl [vmem:[#allocation1] sm:$0xff pattern:$0x75316420]
  %vm90 = vcmask 23552
  %v92 = vsel %vm90, %v62, 0
  %vm94 = vcmask 1042432
  %v95 = vsel %vm94, %v80, 0
  %v97 = vsel %vm94, %v81, 0
  %v99 = vsel %vm94, %v82, 0
  %v101 = vsel %vm94, %v83, 0
  %v103 = vsel %vm94, %v84, 0
  %v105 = vsel %vm94, %v85, 0
  %v107 = vsel %vm94, %v86, 0
  %v109 = vsel %vm94, %v87, 0
  %v111 = vsel %vm94, %v89, 0
  %113 = vmatpush.msra.mxu0 0.0
  %114 = vmatpush.msra.mxu0 0.0
  %115 = vmatpush.msra.mxu0 0.0
  %116 = vmatpush.msra.mxu0 0.0
  %117 = vmatpush.msra.mxu0 0.0
  %118 = vmatpush.msra.mxu0 0.0
  %119 = vmatpush.msra.mxu0 0.0
  %120 = vmatpush.msra.mxu0 0.0
  %121 = vmatpush.msra.mxu0 0.0
  %122 = vmatpush.msra.mxu0 0.0
  %123 = vmatpush.msra.mxu0 0.0
  %124 = vmatpush.msra.mxu0 0.0
  %125 = vmatpush.msra.mxu0 0.0
  %126 = vmatpush.msra.mxu0 0.0
  %127 = vmatpush.msra.mxu0 0.0
  %128 = vmatpush.msra.mxu0 %v95
  %129 = vmatmul.f32.gmra.mxu0 %v92
  %v130 = vpop.f32.mrf.mxu0
  %v131 = vadd.f32 0.0, %v130
  %132 = vdwg.mxu0
  %133 = vmatpush.msra.mxu0 0.0
  %134 = vmatpush.msra.mxu0 0.0
  %135 = vmatpush.msra.mxu0 0.0
  %136 = vmatpush.msra.mxu0 0.0
  %137 = vmatpush.msra.mxu0 0.0
  %138 = vmatpush.msra.mxu0 0.0
  %139 = vmatpush.msra.mxu0 0.0
  %140 = vmatpush.msra.mxu0 0.0
  %141 = vmatpush.msra.mxu0 0.0
  %142 = vmatpush.msra.mxu0 0.0
  %143 = vmatpush.msra.mxu0 0.0
  %144 = vmatpush.msra.mxu0 0.0
  %145 = vmatpush.msra.mxu0 0.0
  %146 = vmatpush.msra.mxu0 0.0
  %147 = vmatpush.msra.mxu0 0.0
  %148 = vmatpush.msra.mxu0 %v97
  %149 = vmatmul.f32.gmra.mxu0 %v92
  %v150 = vpop.f32.mrf.mxu0
  %v151 = vadd.f32 0.0, %v150
  %152 = vdwg.mxu0
  %153 = vmatpush.msra.mxu0 0.0
  %154 = vmatpush.msra.mxu0 0.0
  %155 = vmatpush.msra.mxu0 0.0
  %156 = vmatpush.msra.mxu0 0.0
  %157 = vmatpush.msra.mxu0 0.0
  %158 = vmatpush.msra.mxu0 0.0
  %159 = vmatpush.msra.mxu0 0.0
  %160 = vmatpush.msra.mxu0 0.0
  %161 = vmatpush.msra.mxu0 0.0
  %162 = vmatpush.msra.mxu0 0.0
  %163 = vmatpush.msra.mxu0 0.0
  %164 = vmatpush.msra.mxu0 0.0
  %165 = vmatpush.msra.mxu0 0.0
  %166 = vmatpush.msra.mxu0 0.0
  %167 = vmatpush.msra.mxu0 0.0
  %168 = vmatpush.msra.mxu0 %v99
  %169 = vmatmul.f32.gmra.mxu0 %v92
  %v170 = vpop.f32.mrf.mxu0
  %v171 = vadd.f32 0.0, %v170
  %172 = vdwg.mxu0
  %173 = vmatpush.msra.mxu0 0.0
  %174 = vmatpush.msra.mxu0 0.0
  %175 = vmatpush.msra.mxu0 0.0
  %176 = vmatpush.msra.mxu0 0.0
  %177 = vmatpush.msra.mxu0 0.0
  %178 = vmatpush.msra.mxu0 0.0
  %179 = vmatpush.msra.mxu0 0.0
  %180 = vmatpush.msra.mxu0 0.0
  %181 = vmatpush.msra.mxu0 0.0
  %182 = vmatpush.msra.mxu0 0.0
  %183 = vmatpush.msra.mxu0 0.0
  %184 = vmatpush.msra.mxu0 0.0
  %185 = vmatpush.msra.mxu0 0.0
  %186 = vmatpush.msra.mxu0 0.0
  %187 = vmatpush.msra.mxu0 0.0
  %188 = vmatpush.msra.mxu0 %v101
  %189 = vmatmul.f32.gmra.mxu0 %v92
  %v190 = vpop.f32.mrf.mxu0
  %v191 = vadd.f32 0.0, %v190
  %192 = vdwg.mxu0
  %193 = vmatpush.msra.mxu0 0.0
  %194 = vmatpush.msra.mxu0 0.0
  %195 = vmatpush.msra.mxu0 0.0
  %196 = vmatpush.msra.mxu0 0.0
  %197 = vmatpush.msra.mxu0 0.0
  %198 = vmatpush.msra.mxu0 0.0
  %199 = vmatpush.msra.mxu0 0.0
  %200 = vmatpush.msra.mxu0 0.0
  %201 = vmatpush.msra.mxu0 0.0
  %202 = vmatpush.msra.mxu0 0.0
  %203 = vmatpush.msra.mxu0 0.0
  %204 = vmatpush.msra.mxu0 0.0
  %205 = vmatpush.msra.mxu0 0.0
  %206 = vmatpush.msra.mxu0 0.0
  %207 = vmatpush.msra.mxu0 0.0
  %208 = vmatpush.msra.mxu0 %v103
  %209 = vmatmul.f32.gmra.mxu0 %v92
  %v210 = vpop.f32.mrf.mxu0
  %v211 = vadd.f32 0.0, %v210
  %212 = vdwg.mxu0
  %213 = vmatpush.msra.mxu0 0.0
  %214 = vmatpush.msra.mxu0 0.0
  %215 = vmatpush.msra.mxu0 0.0
  %216 = vmatpush.msra.mxu0 0.0
  %217 = vmatpush.msra.mxu0 0.0
  %218 = vmatpush.msra.mxu0 0.0
  %219 = vmatpush.msra.mxu0 0.0
  %220 = vmatpush.msra.mxu0 0.0
  %221 = vmatpush.msra.mxu0 0.0
  %222 = vmatpush.msra.mxu0 0.0
  %223 = vmatpush.msra.mxu0 0.0
  %224 = vmatpush.msra.mxu0 0.0
  %225 = vmatpush.msra.mxu0 0.0
  %226 = vmatpush.msra.mxu0 0.0
  %227 = vmatpush.msra.mxu0 0.0
  %228 = vmatpush.msra.mxu0 %v105
  %229 = vmatmul.f32.gmra.mxu0 %v92
  %v230 = vpop.f32.mrf.mxu0
  %v231 = vadd.f32 0.0, %v230
  %232 = vdwg.mxu0
  %233 = vmatpush.msra.mxu0 0.0
  %234 = vmatpush.msra.mxu0 0.0
  %235 = vmatpush.msra.mxu0 0.0
  %236 = vmatpush.msra.mxu0 0.0
  %237 = vmatpush.msra.mxu0 0.0
  %238 = vmatpush.msra.mxu0 0.0
  %239 = vmatpush.msra.mxu0 0.0
  %240 = vmatpush.msra.mxu0 0.0
  %241 = vmatpush.msra.mxu0 0.0
  %242 = vmatpush.msra.mxu0 0.0
  %243 = vmatpush.msra.mxu0 0.0
  %244 = vmatpush.msra.mxu0 0.0
  %245 = vmatpush.msra.mxu0 0.0
  %246 = vmatpush.msra.mxu0 0.0
  %247 = vmatpush.msra.mxu0 0.0
  %248 = vmatpush.msra.mxu0 %v107
  %249 = vmatmul.f32.gmra.mxu0 %v92
  %v250 = vpop.f32.mrf.mxu0
  %v251 = vadd.f32 0.0, %v250
  %252 = vdwg.mxu0
  %253 = vmatpush.msra.mxu0 0.0
  %254 = vmatpush.msra.mxu0 0.0
  %255 = vmatpush.msra.mxu0 0.0
  %256 = vmatpush.msra.mxu0 0.0
  %257 = vmatpush.msra.mxu0 0.0
  %258 = vmatpush.msra.mxu0 0.0
  %259 = vmatpush.msra.mxu0 0.0
  %260 = vmatpush.msra.mxu0 0.0
  %261 = vmatpush.msra.mxu0 0.0
  %262 = vmatpush.msra.mxu0 0.0
  %263 = vmatpush.msra.mxu0 0.0
  %264 = vmatpush.msra.mxu0 0.0
  %265 = vmatpush.msra.mxu0 0.0
  %266 = vmatpush.msra.mxu0 0.0
  %267 = vmatpush.msra.mxu0 0.0
  %268 = vmatpush.msra.mxu0 %v109
  %269 = vmatmul.f32.gmra.mxu0 %v92
  %v270 = vpop.f32.mrf.mxu0
  %v271 = vadd.f32 0.0, %v270
  %272 = vdwg.mxu0
  %273 = vmatpush.msra.mxu0 0.0
  %274 = vmatpush.msra.mxu0 0.0
  %275 = vmatpush.msra.mxu0 0.0
  %276 = vmatpush.msra.mxu0 0.0
  %277 = vmatpush.msra.mxu0 0.0
  %278 = vmatpush.msra.mxu0 0.0
  %279 = vmatpush.msra.mxu0 0.0
  %280 = vmatpush.msra.mxu0 0.0
  %281 = vmatpush.msra.mxu0 0.0
  %282 = vmatpush.msra.mxu0 0.0
  %283 = vmatpush.msra.mxu0 0.0
  %284 = vmatpush.msra.mxu0 0.0
  %285 = vmatpush.msra.mxu0 0.0
  %286 = vmatpush.msra.mxu0 0.0
  %287 = vmatpush.msra.mxu0 0.0
  %288 = vmatpush.msra.mxu0 %v111
  %289 = vmatmul.f32.gmra.mxu0 %v92
  %v290 = vpop.f32.mrf.mxu0
  %v291 = vadd.f32 0.0, %v290
  %292 = vdwg.mxu0
  %v293 = vpack.c.bf16 %v151, %v131
  %v294 = vpack.c.bf16 %v191, %v171
  %v295 = vpack.c.bf16 %v231, %v211
  %v296 = vpack.c.bf16 %v271, %v251
  %v297 = vpack.c.bf16 %v291, %v291
  %v303 = vrot.slane %v293, 3
  %v304 = vrot.slane %v294, 6
  %v305 = vrot.slane %v294, 1
  %v306 = vrot.slane %v295, 4
  %v307 = vrot.slane %v295, 7
  %v308 = vrot.slane %v296, 2
  %v309 = vrot.slane %v296, 5
  %v310 = vrot.slane %v297, 3
  %vm311 = vcmask 1040384
  %v314 = vsel %vm311, %v293, %v303
  %vm315 = vcmask 1042434
  %v318 = vsel %vm315, %v304, %v305
  %vm319 = vcmask 1041408
  %v320 = vsel %vm319, %v314, %v318
  %vm321 = vcmask 1044484
  %v324 = vsel %vm321, %v306, %v307
  %vm325 = vcmask 1046534
  %v328 = vsel %vm325, %v308, %v309
  %vm329 = vcmask 1045508
  %v330 = vsel %vm329, %v324, %v328
  %vm331 = vcmask 1043456
  %v332 = vsel %vm331, %v320, %v330
  %v335 = vsel %vm311, %v297, %v310
  %vm338 = vcmask 1040384
  %vm339 = vsmask.f32 256
  %vm340 = vmand %vm338, %vm339
  %vm341 = vcmask 1041409
  %vm342 = vsmask.f32 1280
  %vm343 = vmand %vm341, %vm342
  %vm344 = vmor %vm343, %vm340
  %vm345 = vcmask 1042434
  %vm346 = vsmask.f32 2304
  %vm347 = vmand %vm345, %vm346
  %vm348 = vmor %vm347, %vm344
  %vm349 = vcmask 1043459
  %vm350 = vsmask.f32 3328
  %vm351 = vmand %vm349, %vm350
  %vm352 = vmor %vm351, %vm348
  %vm353 = vcmask 1044484
  %vm354 = vsmask.f32 4352
  %vm355 = vmand %vm353, %vm354
  %vm356 = vmor %vm355, %vm352
  %vm357 = vcmask 1045509
  %vm358 = vsmask.f32 5376
  %vm359 = vmand %vm357, %vm358
  %vm360 = vmor %vm359, %vm356
  %vm361 = vcmask 1046534
  %vm362 = vsmask.f32 6400
  %vm363 = vmand %vm361, %vm362
  %vm364 = vmor %vm363, %vm360
  %vm365 = vcmask 1047559
  %vm366 = vsmask.f32 7424
  %vm367 = vmand %vm365, %vm366
  %vm368 = vmor %vm367, %vm364
  %v369 = vld [vmem:[%s4] sm:$0xff]
  %v370 = vsel %vm368, %v332, %v369
  %371 = vst [vmem:[%s4] sm:$0xff] %v370
  %v372 = vld [vmem:[%s4 + $0x8] sm:$0x1]
  %v373 = vsel %vm340, %v335, %v372
  %374 = vst [vmem:[%s4 + $0x8] sm:$0x1] %v373
  // Predicated region
  $region18: #{forward.2} parent=0 // pred_check
    _
  $region19: #{forward.2} parent=0 // pred_check_branch
    %376 = sbr.rel (0) target = $region21
  $region20: #{forward.2} parent=0 // pred_region
    _
  $region21: #{forward.2} parent=0 // pred_fallthru
    _
  // Predicated region
  $region22: #{forward.2} parent=0 // pred_check
    _
  $region23: #{forward.2} parent=0 // pred_check_branch
    %378 = sbr.rel (0) target = $region25
  $region24: #{forward.2} parent=0 // pred_region
    _
  $region25: #{forward.2} parent=0 // pred_fallthru
    _

// kernel: forward.3
$region0: #{forward.3}
  #allocation0 [shape = 'u32[]', space=smem, size = 0x4, offset = 0x4, fixed_abs, tag = 'smem constant byte address 0x4 - core index']
  #allocation1 [shape = 'u32[72,128]{1,0:T(1,128)}', space=vmem, size = 0x9000, scoped, tag = 'internal scratch']
  %s0 = inlined_call_operand.vmem [shape: bf16[9,16,8], index: 0, kind: input, shape index: {}]
  %s1 = inlined_call_operand.vmem [shape: bf16[3,8,256], index: 1, kind: input, shape index: {}]
  %s2 = inlined_call_operand.vmem [shape: f32[16,288], index: 2, kind: output, shape index: {}]
  %s3 = sld [smem:[#allocation0]]
  $region75: #{forward.3} parent=0
    _
  %s5 = ssub.s32 1, %s3
  %s6 = scalar_select 0, %s5, %s3
  $region1: #{forward.3} parent=0
    #allocation2 [shape = 'u8[16384]{0}', space=vmem, size = 0x4000, scoped, tag = 'output window, operand 0']
    loop: start=0, step=1, limit=5
    $region2: #{forward.3} parent=1 // loop_pre_header
      _
    $region3: #{forward.3} parent=1 // loop_header
      %s8 = sphi 0, %s12
      %p9 = scmp.ge.s32.totalorder %s8, 5
      %s16 = sphi 0, %s16
      %s18 = sphi 0, %s16
      %s19 = sphi 0, %s18
      %s33 = sphi 0, %s19
      %s39 = sphi 0, %s41
      %s42 = sphi 0, %s39
      %s43 = sphi 0, %s42
      %s59 = sphi 0, %s43
      %s65 = sphi 0, %s67
      %s68 = sphi 0, %s65
      %s69 = sphi 0, %s68
      %s85 = sphi 0, %s69
    $region4: #{forward.3} parent=1 // loop_header_branch
      %11 = sbr.rel (%p9) target = $region8
    $region5: #{forward.3} parent=1 // loop_body
      %s13 = ssub.s32 %s8, 1
      %s14 = ssub.s32 %s8, 2
      %s15 = sadd.s32 %s8, 1
      %s17 = sadd.s32 %s16, 1
      %p20 = scmp.eq.s32.totalorder %s8, 2
      %p21 = scmp.ne.s32.totalorder %s16, %s18
      %p22 = scmp.eq.s32.totalorder %s8, 0
      %p23 = por %p21, %p22
      %p24 = scmp.ne.s32.totalorder %s16, %s18
      %p25 = scmp.eq.s32.totalorder %s13, 2
      %p26 = por %p24, %p25
      %p27 = scmp.ne.s32.totalorder %s18, %s19
      %p28 = scmp.eq.s32.totalorder %s13, 0
      %p29 = por %p27, %p28
      %p30 = scmp.ne.s32.totalorder %s18, %s19
      %p31 = scmp.eq.s32.totalorder %s14, 2
      %p32 = por %p30, %p31
      %p34 = scmp.ne.s32.totalorder %s19, %s33
      %p35 = scmp.eq.s32.totalorder %s14, 0
      %p36 = por %p34, %p35
      %s37 = ssub.s32 %s8, %s15
      %p38 = scmp.eq.s32.totalorder %s37, 0
      %s40 = sadd.s32 %s39, 1
      %s41 = scalar_select %p38, %s39, %s40
      %p44 = pneg %p38
      %p45 = scmp.eq.s32.totalorder %s8, 2
      %p46 = por %p44, %p45
      %p47 = scmp.ne.s32.totalorder %s39, %s42
      %p48 = scmp.eq.s32.totalorder %s8, 0
      %p49 = por %p47, %p48
      %p50 = scmp.ne.s32.totalorder %s39, %s42
      %p51 = scmp.eq.s32.totalorder %s13, 2
      %p52 = por %p50, %p51
      %p53 = scmp.ne.s32.totalorder %s42, %s43
      %p54 = scmp.eq.s32.totalorder %s13, 0
      %p55 = por %p53, %p54
      %p56 = scmp.ne.s32.totalorder %s42, %s43
      %p57 = scmp.eq.s32.totalorder %s14, 2
      %p58 = por %p56, %p57
      %p60 = scmp.ne.s32.totalorder %s43, %s59
      %p61 = scmp.eq.s32.totalorder %s14, 0
      %p62 = por %p60, %p61
      %s63 = ssub.s32 %s8, %s15
      %p64 = scmp.eq.s32.totalorder %s63, 0
      %s66 = sadd.s32 %s65, 1
      %s67 = scalar_select %p64, %s65, %s66
      %p70 = pneg %p64
      %p71 = scmp.eq.s32.totalorder %s8, 2
      %p72 = por %p70, %p71
      %p73 = scmp.ne.s32.totalorder %s65, %s68
      %p74 = scmp.eq.s32.totalorder %s8, 0
      %p75 = por %p73, %p74
      %p76 = scmp.ne.s32.totalorder %s65, %s68
      %p77 = scmp.eq.s32.totalorder %s13, 2
      %p78 = por %p76, %p77
      %p79 = scmp.ne.s32.totalorder %s68, %s69
      %p80 = scmp.eq.s32.totalorder %s13, 0
      %p81 = por %p79, %p80
      %p82 = scmp.ne.s32.totalorder %s68, %s69
      %p83 = scmp.eq.s32.totalorder %s14, 2
      %p84 = por %p82, %p83
      %p86 = scmp.ne.s32.totalorder %s69, %s85
      %p87 = scmp.eq.s32.totalorder %s14, 0
      %p88 = por %p86, %p87
      %p89 = scmp.le.s32.totalorder 1, %s8
      %p90 = scmp.lt.s32.totalorder %s8, 4
      %p91 = pnand %p89, %p90
      %p92 = pneg %p91
      // Predicated region
      $region9: #{forward.3} parent=5 // pred_check
        _
      $region10: #{forward.3} parent=5 // pred_check_branch
        %94 = sbr.rel (%p91) target = $region12
      $region11: #{forward.3} parent=5 // pred_region
        %s95 = ssub.s32 %s8, 1
        // Predicated region
        $region13: #{forward.3} parent=11 // pred_check
          %p96 = pneg %p29
        $region14: #{forward.3} parent=11 // pred_check_branch
          %98 = sbr.rel (%p96) target = $region16
        $region15: #{forward.3} parent=11 // pred_region
          _
        $region16: #{forward.3} parent=11 // pred_fallthru
          _
      $region12: #{forward.3} parent=5 // pred_fallthru
        _
      %p99 = scmp.lt.s32.totalorder %s8, 3
      // Predicated region
      $region17: #{forward.3} parent=5 // pred_check
        %p100 = pneg %p99
      $region18: #{forward.3} parent=5 // pred_check_branch
        %102 = sbr.rel (%p100) target = $region20
      $region19: #{forward.3} parent=5 // pred_region
        // Predicated region
        $region21: #{forward.3} parent=19 // pred_check
          %p103 = pneg %p49
        $region22: #{forward.3} parent=19 // pred_check_branch
          %105 = sbr.rel (%p103) target = $region24
        $region23: #{forward.3} parent=19 // pred_region
          %p106 = scmp.lt.s32.totalorder %s8, 2
          %s107 = scalar_select %p106, %s8, 2
          %s108 = smul.addr %s107, 2
          %s109 = smul.addr %s108, 4
          %s110 = scalar_lea.vmem %s1, %s109
        $region24: #{forward.3} parent=19 // pred_fallthru
          _
      $region20: #{forward.3} parent=5 // pred_fallthru
        _
      %p111 = scmp.le.s32.totalorder 1, %s8
      %p112 = scmp.lt.s32.totalorder %s8, 4
      %p113 = pnand %p111, %p112
      %p114 = pneg %p113
      // Predicated region
      $region25: #{forward.3} parent=5 // pred_check
        _
      $region26: #{forward.3} parent=5 // pred_check_branch
        %116 = sbr.rel (%p113) target = $region28
      $region27: #{forward.3} parent=5 // pred_region
        %s117 = ssub.s32 %s8, 1
        %p118 = pneg %p29
        %p119 = pneg %p26
        %p120 = scmp.lt.s32.totalorder %s13, 2
        %s121 = scalar_select %p120, %s13, 2
        %s122 = smul.addr %s121, 2
        %s123 = smul.addr %s122, 4
        %s124 = scalar_lea.vmem %s1, %s123
        %p125 = pneg %p55
        %p126 = pneg %p52
        %p127 = pneg %p81
        %p128 = pneg %p78
        %s129 = sand.u32 %s68, 1
        %s130 = sand.u32 %s68, 1
        %s131 = smul.addr %s130, 16
        %s132 = scalar_lea.vmem [#allocation2], %s131
        %p133 = scmp.lt.s32.totalorder %s13, 2
        %s134 = scalar_select %p133, %s13, 2
        %s135 = smul.addr %s134, 2
        %s136 = smul.addr %s135, 4
        %s137 = scalar_lea.vmem %s1, %s136
        %v139 = vld [vmem:[%s0] sm:$0xf]
        %v140 = vld [vmem:[%s0 + $0x4] sm:$0xf]
        %v141 = vld [vmem:[%s137] sm:$0xf]
        %v144 = vunpack.c.l.b16 %v139
        %v145 = vunpack.c.l.b16 %v140
        %v146 = vpack.c.b16 %v145, %v144
        %vm147 = vcmask 64512
        %v149 = vsel %vm147, %v146, 0
        %vm151 = vcmask 1043456
        %v153 = vsel %vm151, %v141, 0
        %155 = vmatpush.bf16.msra.mxu0 0
        %156 = vmatpush.bf16.msra.mxu0 0
        %157 = vmatpush.bf16.msra.mxu0 0
        %158 = vmatpush.bf16.msra.mxu0 0
        %159 = vmatpush.bf16.msra.mxu0 0
        %160 = vmatpush.bf16.msra.mxu0 0
        %161 = vmatpush.bf16.msra.mxu0 0
        %162 = vmatpush.bf16.msra.mxu0 %v153
        %163 = vmatmul.bf16.gmra.mxu0 %v149
        %v164 = vpop.f32.mrf.mxu0
        %v165 = vadd.f32 0.0, %v164
        %v166 = vpop.f32.mrf.mxu0
        %v167 = vadd.f32 0.0, %v166
        %168 = vdwg.mxu0
        %169 = vst [vmem:[%s132] sm:$0xff] %v165
        %170 = vst [vmem:[%s132 + $0x8] sm:$0xff] %v167
        %s171 = scalar_lea.vmem %s0, 8
        %v172 = vld [vmem:[%s171] sm:$0xf]
        %v173 = vld [vmem:[%s171 + $0x4] sm:$0xf]
        %v174 = vld [vmem:[%s137] sm:$0xff]
        %v177 = vunpack.c.l.b16 %v172
        %v178 = vunpack.c.l.b16 %v173
        %v179 = vpack.c.b16 %v178, %v177
        %v181 = vunpack.c.l.b16 %v174
        %v182 = vunpack.c.h.b16 %v174
        %v183 = vpack.c.b16 %v181, %v181
        %v184 = vpack.c.b16 %v182, %v182
        %185 = vrot.lane.b32.xlu0 %v183, 127
        %v186 = vpop.permute.xlu0 %185
        %187 = vrot.lane.b32.xlu0 %v184, 127
        %v188 = vpop.permute.xlu0 %187
        %vm189 = vcmask 1039360
        %v190 = vsel %vm189, %v186, %v188
        %v192 = vsel %vm147, %v179, 0
        %v195 = vsel %vm151, %v190, 0
        %197 = vmatpush.bf16.msra.mxu0 0
        %198 = vmatpush.bf16.msra.mxu0 0
        %199 = vmatpush.bf16.msra.mxu0 0
        %200 = vmatpush.bf16.msra.mxu0 0
        %201 = vmatpush.bf16.msra.mxu0 0
        %202 = vmatpush.bf16.msra.mxu0 0
        %203 = vmatpush.bf16.msra.mxu0 0
        %204 = vmatpush.bf16.msra.mxu0 %v195
        %205 = vmatmul.bf16.gmra.mxu0 %v192
        %v206 = vpop.f32.mrf.mxu0
        %v207 = vadd.f32 0.0, %v206
        %v208 = vpop.f32.mrf.mxu0
        %v209 = vadd.f32 0.0, %v208
        %210 = vdwg.mxu0
        %v211 = vld [vmem:[%s132] sm:$0xff]
        %v212 = vld [vmem:[%s132 + $0x8] sm:$0xff]
        %v213 = vadd.f32 %v211, %v207
        %v214 = vadd.f32 %v212, %v209
        %215 = vst [vmem:[%s132] sm:$0xff] %v213
        %216 = vst [vmem:[%s132 + $0x8] sm:$0xff] %v214
        %s217 = scalar_lea.vmem %s0, 16
        %v218 = vld [vmem:[%s217] sm:$0xf]
        %v219 = vld [vmem:[%s217 + $0x4] sm:$0xf]
        %v220 = vld [vmem:[%s137] sm:$0xff]
        %v223 = vunpack.c.l.b16 %v218
        %v224 = vunpack.c.l.b16 %v219
        %v225 = vpack.c.b16 %v224, %v223
        %v227 = vunpack.c.l.b16 %v220
        %v228 = vunpack.c.h.b16 %v220
        %v229 = vpack.c.b16 %v227, %v227
        %v230 = vpack.c.b16 %v228, %v228
        %231 = vrot.lane.b32.xlu0 %v229, 126
        %v232 = vpop.permute.xlu0 %231
        %233 = vrot.lane.b32.xlu0 %v230, 126
        %v234 = vpop.permute.xlu0 %233
        %vm235 = vcmask 1031168
        %v236 = vsel %vm235, %v232, %v234
        %v238 = vsel %vm147, %v225, 0
        %v241 = vsel %vm151, %v236, 0
        %243 = vmatpush.bf16.msra.mxu0 0
        %244 = vmatpush.bf16.msra.mxu0 0
        %245 = vmatpush.bf16.msra.mxu0 0
        %246 = vmatpush.bf16.msra.mxu0 0
        %247 = vmatpush.bf16.msra.mxu0 0
        %248 = vmatpush.bf16.msra.mxu0 0
        %249 = vmatpush.bf16.msra.mxu0 0
        %250 = vmatpush.bf16.msra.mxu0 %v241
        %251 = vmatmul.bf16.gmra.mxu0 %v238
        %v252 = vpop.f32.mrf.mxu0
        %v253 = vadd.f32 0.0, %v252
        %v254 = vpop.f32.mrf.mxu0
        %v255 = vadd.f32 0.0, %v254
        %256 = vdwg.mxu0
        %v257 = vld [vmem:[%s132] sm:$0xff]
        %v258 = vld [vmem:[%s132 + $0x8] sm:$0xff]
        %v259 = vadd.f32 %v257, %v253
        %v260 = vadd.f32 %v258, %v255
        %261 = vst [vmem:[%s132] sm:$0xff] %v259
        %262 = vst [vmem:[%s132 + $0x8] sm:$0xff] %v260
        %s263 = scalar_lea.vmem %s0, 24
        %v264 = vld [vmem:[%s263] sm:$0xf]
        %v265 = vld [vmem:[%s263 + $0x4] sm:$0xf]
        %v266 = vld [vmem:[%s137] sm:$0xff]
        %v269 = vunpack.c.l.b16 %v264
        %v270 = vunpack.c.l.b16 %v265
        %v271 = vpack.c.b16 %v270, %v269
        %v273 = vunpack.c.l.b16 %v266
        %v274 = vunpack.c.h.b16 %v266
        %v275 = vpack.c.b16 %v273, %v273
        %v276 = vpack.c.b16 %v274, %v274
        %277 = vrot.lane.b32.xlu0 %v275, 110
        %v278 = vpop.permute.xlu0 %277
        %279 = vrot.lane.b32.xlu0 %v276, 110
        %v280 = vpop.permute.xlu0 %279
        %vm281 = vcmask 900096
        %v282 = vsel %vm281, %v278, %v280
        %v284 = vsel %vm147, %v271, 0
        %v287 = vsel %vm151, %v282, 0
        %289 = vmatpush.bf16.msra.mxu0 0
        %290 = vmatpush.bf16.msra.mxu0 0
        %291 = vmatpush.bf16.msra.mxu0 0
        %292 = vmatpush.bf16.msra.mxu0 0
        %293 = vmatpush.bf16.msra.mxu0 0
        %294 = vmatpush.bf16.msra.mxu0 0
        %295 = vmatpush.bf16.msra.mxu0 0
        %296 = vmatpush.bf16.msra.mxu0 %v287
        %297 = vmatmul.bf16.gmra.mxu0 %v284
        %v298 = vpop.f32.mrf.mxu0
        %v299 = vadd.f32 0.0, %v298
        %v300 = vpop.f32.mrf.mxu0
        %v301 = vadd.f32 0.0, %v300
        %302 = vdwg.mxu0
        %v303 = vld [vmem:[%s132] sm:$0xff]
        %v304 = vld [vmem:[%s132 + $0x8] sm:$0xff]
        %v305 = vadd.f32 %v303, %v299
        %v306 = vadd.f32 %v304, %v301
        %307 = vst [vmem:[%s132] sm:$0xff] %v305
        %308 = vst [vmem:[%s132 + $0x8] sm:$0xff] %v306
        %s309 = scalar_lea.vmem %s0, 32
        %v310 = vld [vmem:[%s309] sm:$0xf]
        %v311 = vld [vmem:[%s309 + $0x4] sm:$0xf]
        %v312 = vld [vmem:[%s137] sm:$0xff]
        %v315 = vunpack.c.l.b16 %v310
        %v316 = vunpack.c.l.b16 %v311
        %v317 = vpack.c.b16 %v316, %v315
        %v319 = vunpack.c.l.b16 %v312
        %v320 = vunpack.c.h.b16 %v312
        %v321 = vpack.c.b16 %v319, %v319
        %v322 = vpack.c.b16 %v320, %v320
        %323 = vrot.lane.b32.xlu0 %v321, 109
        %v324 = vpop.permute.xlu0 %323
        %325 = vrot.lane.b32.xlu0 %v322, 109
        %v326 = vpop.permute.xlu0 %325
        %vm327 = vcmask 891904
        %v328 = vsel %vm327, %v324, %v326
        %v330 = vsel %vm147, %v317, 0
        %v333 = vsel %vm151, %v328, 0
        %335 = vmatpush.bf16.msra.mxu0 0
        %336 = vmatpush.bf16.msra.mxu0 0
        %337 = vmatpush.bf16.msra.mxu0 0
        %338 = vmatpush.bf16.msra.mxu0 0
        %339 = vmatpush.bf16.msra.mxu0 0
        %340 = vmatpush.bf16.msra.mxu0 0
        %341 = vmatpush.bf16.msra.mxu0 0
        %342 = vmatpush.bf16.msra.mxu0 %v333
        %343 = vmatmul.bf16.gmra.mxu0 %v330
        %v344 = vpop.f32.mrf.mxu0
        %v345 = vadd.f32 0.0, %v344
        %v346 = vpop.f32.mrf.mxu0
        %v347 = vadd.f32 0.0, %v346
        %348 = vdwg.mxu0
        %v349 = vld [vmem:[%s132] sm:$0xff]
        %v350 = vld [vmem:[%s132 + $0x8] sm:$0xff]
        %v351 = vadd.f32 %v349, %v345
        %v352 = vadd.f32 %v350, %v347
        %353 = vst [vmem:[%s132] sm:$0xff] %v351
        %354 = vst [vmem:[%s132 + $0x8] sm:$0xff] %v352
        %s355 = scalar_lea.vmem %s0, 40
        %v356 = vld [vmem:[%s355] sm:$0xf]
        %v357 = vld [vmem:[%s355 + $0x4] sm:$0xf]
        %v358 = vld [vmem:[%s137] sm:$0xff]
        %v361 = vunpack.c.l.b16 %v356
        %v362 = vunpack.c.l.b16 %v357
        %v363 = vpack.c.b16 %v362, %v361
        %v365 = vunpack.c.l.b16 %v358
        %v366 = vunpack.c.h.b16 %v358
        %v367 = vpack.c.b16 %v365, %v365
        %v368 = vpack.c.b16 %v366, %v366
        %369 = vrot.lane.b32.xlu0 %v367, 108
        %v370 = vpop.permute.xlu0 %369
        %371 = vrot.lane.b32.xlu0 %v368, 108
        %v372 = vpop.permute.xlu0 %371
        %vm373 = vcmask 883712
        %v374 = vsel %vm373, %v370, %v372
        %v376 = vsel %vm147, %v363, 0
        %v379 = vsel %vm151, %v374, 0
        %381 = vmatpush.bf16.msra.mxu0 0
        %382 = vmatpush.bf16.msra.mxu0 0
        %383 = vmatpush.bf16.msra.mxu0 0
        %384 = vmatpush.bf16.msra.mxu0 0
        %385 = vmatpush.bf16.msra.mxu0 0
        %386 = vmatpush.bf16.msra.mxu0 0
        %387 = vmatpush.bf16.msra.mxu0 0
        %388 = vmatpush.bf16.msra.mxu0 %v379
        %389 = vmatmul.bf16.gmra.mxu0 %v376
        %v390 = vpop.f32.mrf.mxu0
        %v391 = vadd.f32 0.0, %v390
        %v392 = vpop.f32.mrf.mxu0
        %v393 = vadd.f32 0.0, %v392
        %394 = vdwg.mxu0
        %v395 = vld [vmem:[%s132] sm:$0xff]
        %v396 = vld [vmem:[%s132 + $0x8] sm:$0xff]
        %v397 = vadd.f32 %v395, %v391
        %v398 = vadd.f32 %v396, %v393
        %399 = vst [vmem:[%s132] sm:$0xff] %v397
        %400 = vst [vmem:[%s132 + $0x8] sm:$0xff] %v398
        %s401 = scalar_lea.vmem %s0, 48
        %v402 = vld [vmem:[%s401] sm:$0xf]
        %v403 = vld [vmem:[%s401 + $0x4] sm:$0xf]
        %v404 = vld [vmem:[%s137] sm:$0xff]
        %v407 = vunpack.c.l.b16 %v402
        %v408 = vunpack.c.l.b16 %v403
        %v409 = vpack.c.b16 %v408, %v407
        %v411 = vunpack.c.l.b16 %v404
        %v412 = vunpack.c.h.b16 %v404
        %v413 = vpack.c.b16 %v411, %v411
        %v414 = vpack.c.b16 %v412, %v412
        %415 = vrot.lane.b32.xlu0 %v413, 92
        %v416 = vpop.permute.xlu0 %415
        %417 = vrot.lane.b32.xlu0 %v414, 92
        %v418 = vpop.permute.xlu0 %417
        %vm419 = vcmask 752640
        %v420 = vsel %vm419, %v416, %v418
        %v422 = vsel %vm147, %v409, 0
        %v425 = vsel %vm151, %v420, 0
        %427 = vmatpush.bf16.msra.mxu0 0
        %428 = vmatpush.bf16.msra.mxu0 0
        %429 = vmatpush.bf16.msra.mxu0 0
        %430 = vmatpush.bf16.msra.mxu0 0
        %431 = vmatpush.bf16.msra.mxu0 0
        %432 = vmatpush.bf16.msra.mxu0 0
        %433 = vmatpush.bf16.msra.mxu0 0
        %434 = vmatpush.bf16.msra.mxu0 %v425
        %435 = vmatmul.bf16.gmra.mxu0 %v422
        %v436 = vpop.f32.mrf.mxu0
        %v437 = vadd.f32 0.0, %v436
        %v438 = vpop.f32.mrf.mxu0
        %v439 = vadd.f32 0.0, %v438
        %440 = vdwg.mxu0
        %v441 = vld [vmem:[%s132] sm:$0xff]
        %v442 = vld [vmem:[%s132 + $0x8] sm:$0xff]
        %v443 = vadd.f32 %v441, %v437
        %v444 = vadd.f32 %v442, %v439
        %445 = vst [vmem:[%s132] sm:$0xff] %v443
        %446 = vst [vmem:[%s132 + $0x8] sm:$0xff] %v444
        %s447 = scalar_lea.vmem %s0, 56
        %v448 = vld [vmem:[%s447] sm:$0xf]
        %v449 = vld [vmem:[%s447 + $0x4] sm:$0xf]
        %v450 = vld [vmem:[%s137] sm:$0xff]
        %v453 = vunpack.c.l.b16 %v448
        %v454 = vunpack.c.l.b16 %v449
        %v455 = vpack.c.b16 %v454, %v453
        %v457 = vunpack.c.l.b16 %v450
        %v458 = vunpack.c.h.b16 %v450
        %v459 = vpack.c.b16 %v457, %v457
        %v460 = vpack.c.b16 %v458, %v458
        %461 = vrot.lane.b32.xlu0 %v459, 91
        %v462 = vpop.permute.xlu0 %461
        %463 = vrot.lane.b32.xlu0 %v460, 91
        %v464 = vpop.permute.xlu0 %463
        %vm465 = vcmask 744448
        %v466 = vsel %vm465, %v462, %v464
        %v468 = vsel %vm147, %v455, 0
        %v471 = vsel %vm151, %v466, 0
        %473 = vmatpush.bf16.msra.mxu0 0
        %474 = vmatpush.bf16.msra.mxu0 0
        %475 = vmatpush.bf16.msra.mxu0 0
        %476 = vmatpush.bf16.msra.mxu0 0
        %477 = vmatpush.bf16.msra.mxu0 0
        %478 = vmatpush.bf16.msra.mxu0 0
        %479 = vmatpush.bf16.msra.mxu0 0
        %480 = vmatpush.bf16.msra.mxu0 %v471
        %481 = vmatmul.bf16.gmra.mxu0 %v468
        %v482 = vpop.f32.mrf.mxu0
        %v483 = vadd.f32 0.0, %v482
        %v484 = vpop.f32.mrf.mxu0
        %v485 = vadd.f32 0.0, %v484
        %486 = vdwg.mxu0
        %v487 = vld [vmem:[%s132] sm:$0xff]
        %v488 = vld [vmem:[%s132 + $0x8] sm:$0xff]
        %v489 = vadd.f32 %v487, %v483
        %v490 = vadd.f32 %v488, %v485
        %491 = vst [vmem:[%s132] sm:$0xff] %v489
        %492 = vst [vmem:[%s132 + $0x8] sm:$0xff] %v490
        %s493 = scalar_lea.vmem %s0, 64
        %v494 = vld [vmem:[%s493] sm:$0xf]
        %v495 = vld [vmem:[%s493 + $0x4] sm:$0xf]
        %v496 = vld [vmem:[%s137] sm:$0xff]
        %v499 = vunpack.c.l.b16 %v494
        %v500 = vunpack.c.l.b16 %v495
        %v501 = vpack.c.b16 %v500, %v499
        %v503 = vunpack.c.l.b16 %v496
        %v504 = vunpack.c.h.b16 %v496
        %v505 = vpack.c.b16 %v503, %v503
        %v506 = vpack.c.b16 %v504, %v504
        %507 = vrot.lane.b32.xlu0 %v505, 90
        %v508 = vpop.permute.xlu0 %507
        %509 = vrot.lane.b32.xlu0 %v506, 90
        %v510 = vpop.permute.xlu0 %509
        %vm511 = vcmask 736256
        %v512 = vsel %vm511, %v508, %v510
        %v514 = vsel %vm147, %v501, 0
        %v517 = vsel %vm151, %v512, 0
        %519 = vmatpush.bf16.msra.mxu0 0
        %520 = vmatpush.bf16.msra.mxu0 0
        %521 = vmatpush.bf16.msra.mxu0 0
        %522 = vmatpush.bf16.msra.mxu0 0
        %523 = vmatpush.bf16.msra.mxu0 0
        %524 = vmatpush.bf16.msra.mxu0 0
        %525 = vmatpush.bf16.msra.mxu0 0
        %526 = vmatpush.bf16.msra.mxu0 %v517
        %527 = vmatmul.bf16.gmra.mxu0 %v514
        %v528 = vpop.f32.mrf.mxu0
        %v529 = vadd.f32 0.0, %v528
        %v530 = vpop.f32.mrf.mxu0
        %v531 = vadd.f32 0.0, %v530
        %532 = vdwg.mxu0
        %v533 = vld [vmem:[%s132] sm:$0xff]
        %v534 = vld [vmem:[%s132 + $0x8] sm:$0xff]
        %v535 = vadd.f32 %v533, %v529
        %v536 = vadd.f32 %v534, %v531
        %537 = vst [vmem:[%s132] sm:$0xff] %v535
        %538 = vst [vmem:[%s132 + $0x8] sm:$0xff] %v536
        %s539 = sand.u32 %s68, 1
        %s540 = sand.u32 %s68, 1
        %s541 = smul.addr %s540, 16
        %s542 = scalar_lea.vmem [#allocation2], %s541
        // Predicated region
        $region29: #{forward.3} parent=27 // pred_check
          %p543 = pneg %p78
        $region30: #{forward.3} parent=27 // pred_check_branch
          %545 = sbr.rel (%p543) target = $region32
        $region31: #{forward.3} parent=27 // pred_region
          %s546 = smul.addr %s13, 8
          %s547 = scalar_lea.vmem %s2, %s546
          // Predicated region
          $region33: #{forward.3} parent=31 // pred_check
            _
          $region34: #{forward.3} parent=31 // pred_check_branch
            %549 = sbr.rel (0) target = $region36
          $region35: #{forward.3} parent=31 // pred_region
            // Predicated region
            $region37: #{forward.3} parent=35 // pred_check
              _
            $region38: #{forward.3} parent=35 // pred_check_branch
              %551 = sbr.rel (0) target = $region40
            $region39: #{forward.3} parent=35 // pred_region
              // Predicated region
              $region52: #{forward.3} parent=39 // pred_check
                _
              $region53: #{forward.3} parent=39 // pred_check_branch
                %569 = sbr.rel (0) target = $region55
              $region54: #{forward.3} parent=39 // pred_region
                loop: start=0, step=1, limit=1
                $region56: #{forward.3} parent=54 // loop_pre_header
                  _
                $region57: #{forward.3} parent=54 // loop_header
                  %s571 = sphi 0, %s575
                  %p572 = scmp.ge.s32.totalorder %s571, 1
                  %s576 = sphi %s542, %s542
                  %s577 = sphi %s547, %s547
                $region58: #{forward.3} parent=54 // loop_header_branch
                  %574 = sbr.rel (%p572) target = $region62
                $region59: #{forward.3} parent=54 // loop_body
                  %v578 = vld [vmem:[%s576] sm:$0xff]
                  %579 = vst [vmem:[%s577] sm:$0xff] %v578
                  %v580 = vld [vmem:[%s576 + $0x8] sm:$0xff]
                  %581 = vst [vmem:[%s577 + $0x18] sm:$0xff] %v580
                $region60: #{forward.3} parent=54 // loop_footer
                  %s575 = sadd.s32 1, %s571
                $region61: #{forward.3} parent=54 // loop_footer_branch
                  %570 = sbr.rel target = $region57
                $region62: #{forward.3} parent=54 // loop_exit
                  _
              $region55: #{forward.3} parent=39 // pred_fallthru
                _
              // Predicated region
              $region63: #{forward.3} parent=39 // pred_check
                _
              $region64: #{forward.3} parent=39 // pred_check_branch
                %583 = sbr.rel target = $region66
              $region65: #{forward.3} parent=39 // pred_region
                _
              $region66: #{forward.3} parent=39 // pred_fallthru
                _
            $region40: #{forward.3} parent=35 // pred_fallthru
              _
            // Predicated region
            $region41: #{forward.3} parent=35 // pred_check
              _
            $region42: #{forward.3} parent=35 // pred_check_branch
              %553 = sbr.rel target = $region44
            $region43: #{forward.3} parent=35 // pred_region
              %s555 = ssub.s32 256, 1
              loop: start=0, step=1, limit=1
              $region45: #{forward.3} parent=43 // loop_pre_header
                _
              $region46: #{forward.3} parent=43 // loop_header
                %s557 = sphi 0, %s561
                %p558 = scmp.ge.s32.totalorder %s557, 1
                %s562 = sphi %s542, %s542
                %s563 = sphi %s547, %s547
              $region47: #{forward.3} parent=43 // loop_header_branch
                %560 = sbr.rel (%p558) target = $region51
              $region48: #{forward.3} parent=43 // loop_body
                %v564 = vld [vmem:[%s562] sm:%s555]
                %565 = vst [vmem:[%s563] sm:%s555] %v564
                %v566 = vld [vmem:[%s562 + $0x8] sm:%s555]
                %567 = vst [vmem:[%s563 + $0x18] sm:%s555] %v566
              $region49: #{forward.3} parent=43 // loop_footer
                %s561 = sadd.s32 1, %s557
              $region50: #{forward.3} parent=43 // loop_footer_branch
                %556 = sbr.rel target = $region46
              $region51: #{forward.3} parent=43 // loop_exit
                _
            $region44: #{forward.3} parent=35 // pred_fallthru
              _
          $region36: #{forward.3} parent=31 // pred_fallthru
            _
          %584 = vnop
        $region32: #{forward.3} parent=27 // pred_fallthru
          _
      $region28: #{forward.3} parent=5 // pred_fallthru
        _
      %p585 = scmp.le.s32.totalorder 2, %s8
      // Predicated region
      $region67: #{forward.3} parent=5 // pred_check
        %p586 = pneg %p585
      $region68: #{forward.3} parent=5 // pred_check_branch
        %588 = sbr.rel (%p586) target = $region70
      $region69: #{forward.3} parent=5 // pred_region
        %s589 = ssub.s32 %s8, 2
        // Predicated region
        $region71: #{forward.3} parent=69 // pred_check
          %p590 = pneg %p84
        $region72: #{forward.3} parent=69 // pred_check_branch
          %592 = sbr.rel (%p590) target = $region74
        $region73: #{forward.3} parent=69 // pred_region
          %s593 = sand.u32 %s69, 1
          %s594 = sand.u32 %s69, 1
          %s595 = smul.addr %s594, 16
          %s596 = scalar_lea.vmem [#allocation2], %s595
        $region74: #{forward.3} parent=69 // pred_fallthru
          _
      $region70: #{forward.3} parent=5 // pred_fallthru
        _
    $region6: #{forward.3} parent=1 // loop_footer
      %s12 = sadd.s32 1, %s8
    $region7: #{forward.3} parent=1 // loop_footer_branch
      %7 = sbr.rel target = $region3
    $region8: #{forward.3} parent=1 // loop_exit
      _

</llo_original>
